<compile_context>
chip_gen: v5e
topology: v5e:2x2
jax: 0.10.0
libtpu: 0.0.40
codegen_flags: <defaults>
</compile_context>

<pallas_src>
import math

import jax
import jax.numpy as jnp
import numpy as np
from jax.experimental import pallas as pl
from jax.experimental.pallas import tpu as pltpu


def proj_kernel(x_ref, w_ref, h_ref, s_ref):
    """Fused projections: y = x_tile @ [W_self | W_neigh]   (K = D_in)."""
    dp = s_ref.shape[1]
    y = jnp.dot(x_ref[...], w_ref[...], preferred_element_type=jnp.float32)
    s_ref[...] = y[:, :dp]                       # self path, kept in f32
    h_ref[...] = y[:, dp:].astype(h_ref.dtype)   # neighbor projection, bf16 for pass 2


def agg_kernel(a_ref, h_ref, s_ref, o_ref):
    """out_tile = S_tile + sum_k A[i, k_tile] @ H[k_tile]   (f32 accumulation)."""
    k = pl.program_id(1)

    @pl.when(k == 0)
    def _init():
        o_ref[...] = s_ref[...]

    o_ref[...] += jnp.dot(a_ref[...], h_ref[...],
                          preferred_element_type=jnp.float32)


def sage_conv(feat, adj, w_self_t, w_neigh_t, *, tm=256, tk=256):
    """feat: (N, D_in) f32, adj: (N, N) f32 row-normalized adjacency,
    w_*_t: (D_in, D_out) f32 (pre-transposed Linear weights).
    Returns (N, D_out) f32."""
    N, D_in = feat.shape
    D_out = w_self_t.shape[1]
    tm = min(tm, N)
    tk = min(tk, N)
    assert N % tm == 0 and N % tk == 0, "pad N to a multiple of the tile sizes"

    # Lane-dense padded output width (multiple of 128 lanes).
    dp = ((D_out + 127) // 128) * 128

    # bf16 MXU operands; all accumulation stays in f32 inside the kernels.
    x_bf = feat.astype(jnp.bfloat16)
    a_bf = adj.astype(jnp.bfloat16)
    ws_pad = jnp.zeros((D_in, dp), jnp.bfloat16).at[:, :D_out].set(
        w_self_t.astype(jnp.bfloat16))
    wn_pad = jnp.zeros((D_in, dp), jnp.bfloat16).at[:, :D_out].set(
        w_neigh_t.astype(jnp.bfloat16))
    w_cat = jnp.concatenate([ws_pad, wn_pad], axis=1)      # (D_in, 2*dp)

    # ---- pass 1: S = X @ W_self (f32), H = X @ W_neigh (bf16) ----
    proj_vmem = 2 * (tm * D_in * 2 + D_in * 2 * dp * 2 + tm * dp * 2 + tm * dp * 4)
    h, s = pl.pallas_call(
        proj_kernel,
        out_shape=(jax.ShapeDtypeStruct((N, dp), jnp.bfloat16),
                   jax.ShapeDtypeStruct((N, dp), jnp.float32)),
        grid_spec=pltpu.PrefetchScalarGridSpec(
            num_scalar_prefetch=0,
            grid=(N // tm,),
            in_specs=[
                pl.BlockSpec((tm, D_in), lambda i: (i, 0)),       # feature row tile
                pl.BlockSpec((D_in, 2 * dp), lambda i: (0, 0)),   # stacked weights
            ],
            out_specs=[
                pl.BlockSpec((tm, dp), lambda i: (i, 0)),         # H (bf16)
                pl.BlockSpec((tm, dp), lambda i: (i, 0)),         # S (f32)
            ],
        ),
        compiler_params=pltpu.CompilerParams(
            dimension_semantics=("parallel",),
            vmem_limit_bytes=max(2 * proj_vmem, 16 * 1024 * 1024),
        ),
    )(x_bf, w_cat)

    # ---- pass 2: out = S + A @ H, K-tiled over the neighbor dimension ----
    agg_vmem = 2 * (tm * tk * 2 + tk * dp * 2 + tm * dp * 4 + tm * dp * 4)
    out_pad = pl.pallas_call(
        agg_kernel,
        out_shape=jax.ShapeDtypeStruct((N, dp), jnp.float32),
        grid_spec=pltpu.PrefetchScalarGridSpec(
            num_scalar_prefetch=0,
            grid=(N // tm, N // tk),
            in_specs=[
                pl.BlockSpec((tm, tk), lambda i, k: (i, k)),      # adjacency tile
                pl.BlockSpec((tk, dp), lambda i, k: (k, 0)),      # H neighbor slab
                pl.BlockSpec((tm, dp), lambda i, k: (i, 0)),      # self projection
            ],
            out_specs=pl.BlockSpec((tm, dp), lambda i, k: (i, 0)),
        ),
        compiler_params=pltpu.CompilerParams(
            dimension_semantics=("parallel", "arbitrary"),
            vmem_limit_bytes=max(2 * agg_vmem, 16 * 1024 * 1024),
        ),
    )(a_bf, h, s)

    return out_pad[:, :D_out]


def xavier_uniform(key, shape, gain):
    # PyTorch nn.init.xavier_uniform_ on a Linear weight of shape (out, in):
    # fan_in = in_feats, fan_out = out_feats.
    fan_out, fan_in = shape
    bound = gain * math.sqrt(6.0 / (fan_in + fan_out))
    return jax.random.uniform(key, shape, jnp.float32, -bound, bound)


if __name__ == "__main__":
    N, D_in, D_out = 512, 64, 32   # grid of 2 row tiles -> both v7x TensorCores used

    key = jax.random.PRNGKey(0)
    k_feat, k_ws, k_wn, k_adj = jax.random.split(key, 4)

    # Deterministic input features.
    feat = jax.random.normal(k_feat, (N, D_in), jnp.float32)

    # Deterministic parameters (xavier_uniform with relu gain, as in reset_parameters).
    gain = math.sqrt(2.0)  # nn.init.calculate_gain('relu')
    w_self = xavier_uniform(k_ws, (D_out, D_in), gain)    # torch Linear weight (out, in)
    w_neigh = xavier_uniform(k_wn, (D_out, D_in), gain)

    # TODO(synk): the original SpMM runs a TVM sparse kernel over a real DGL graph;
    # here the graph is synthesized as a deterministic row-normalized dense adjacency.
    adj_mask = (jax.random.uniform(k_adj, (N, N)) < 0.05).astype(jnp.float32)
    adj_mask = adj_mask + jnp.eye(N, dtype=jnp.float32)   # ensure no empty rows
    adj = adj_mask / jnp.sum(adj_mask, axis=1, keepdims=True)

    # Pre-transpose Linear weights so kernels compute x @ W.
    w_self_t = w_self.T    # (D_in, D_out)
    w_neigh_t = w_neigh.T  # (D_in, D_out)

    out = sage_conv(feat, adj, w_self_t, w_neigh_t, tm=256, tk=256)
    out = jax.block_until_ready(out)

    # Reference: fc_self(feat) + fc_neigh(A @ feat)   (f32)
    ref = feat @ w_self_t + (adj @ feat) @ w_neigh_t
    # bf16 MXU operands with f32 accumulation -> loosened tolerance.
    np.testing.assert_allclose(np.asarray(out), np.asarray(ref),
                               rtol=2e-2, atol=2e-2)

    print("KERNEL_OK")
</pallas_src>

<mosaic_0001>
module attributes {stable_mosaic.version = 11 : i64} {
  func.func @proj_kernel(%arg0: i32, %arg1: memref<256x64xbf16, #tpu.memory_space<vmem>>, %arg2: memref<64x256xbf16, #tpu.memory_space<vmem>>, %arg3: memref<256x128xbf16, #tpu.memory_space<vmem>>, %arg4: memref<256x128xf32, #tpu.memory_space<vmem>>) attributes {dimension_semantics = [#tpu.dimension_semantics<parallel>], iteration_bounds = array<i64: 2>, scalar_prefetch = 0 : i64, scratch_operands = 0 : i64, tpu.core_type = #tpu.core_type<tc>, window_params = [{transform_indices = @transform_0, window_bounds = array<i64: 256, 64>}, {pipeline_mode = #tpu.pipeline_mode<synchronous>, transform_indices = @transform_1, window_bounds = array<i64: 64, 256>}, {transform_indices = @transform_2, window_bounds = array<i64: 256, 128>}, {transform_indices = @transform_3, window_bounds = array<i64: 256, 128>}]} {
    %c0 = arith.constant 0 : index
    %c0_0 = arith.constant 0 : index
    %0 = vector.load %arg1[%c0, %c0_0] : memref<256x64xbf16, #tpu.memory_space<vmem>>, vector<256x64xbf16>
    %c0_1 = arith.constant 0 : index
    %c0_2 = arith.constant 0 : index
    %1 = vector.load %arg2[%c0_1, %c0_2] : memref<64x256xbf16, #tpu.memory_space<vmem>>, vector<64x256xbf16>
    %cst = arith.constant dense<0.000000e+00> : vector<256x256xf32>
    %2 = tpu.matmul %0, %1, %cst {dimension_numbers = #tpu.dot_dimension_numbers<[1], [0], [0], [1], [0, 0, 1, 1], [], []>} : vector<256x64xbf16>, vector<64x256xbf16>, vector<256x256xf32> -> vector<256x256xf32>
    %3 = vector.extract_strided_slice %2 {offsets = [0, 0], sizes = [256, 128], strides = [1, 1]} : vector<256x256xf32> to vector<256x128xf32>
    %c0_3 = arith.constant 0 : index
    %c0_4 = arith.constant 0 : index
    %4 = vector.load %arg4[%c0_3, %c0_4] : memref<256x128xf32, #tpu.memory_space<vmem>>, vector<256x128xf32>
    tpu.vector_store %arg4[%c0_3, %c0_4], %3 {strides = array<i32>} : memref<256x128xf32, #tpu.memory_space<vmem>>, vector<256x128xf32>,
    %5 = vector.extract_strided_slice %2 {offsets = [0, 128], sizes = [256, 128], strides = [1, 1]} : vector<256x256xf32> to vector<256x128xf32>
    %6 = arith.truncf %5 : vector<256x128xf32> to vector<256x128xbf16>
    %c0_5 = arith.constant 0 : index
    %c0_6 = arith.constant 0 : index
    %7 = vector.load %arg3[%c0_5, %c0_6] : memref<256x128xbf16, #tpu.memory_space<vmem>>, vector<256x128xbf16>
    tpu.vector_store %arg3[%c0_5, %c0_6], %6 {strides = array<i32>} : memref<256x128xbf16, #tpu.memory_space<vmem>>, vector<256x128xbf16>,
    return
  }
  func.func @transform_0(%arg0: i32) -> (i32, i32) {
    %c0_i32 = arith.constant 0 : i32
    %c0_i32_0 = arith.constant 0 : i32
    return %arg0, %c0_i32 : i32, i32
  }
  func.func @transform_1(%arg0: i32) -> (i32, i32) {
    %c0_i32 = arith.constant 0 : i32
    %c0_i32_0 = arith.constant 0 : i32
    %c0_i32_1 = arith.constant 0 : i32
    return %c0_i32, %c0_i32_0 : i32, i32
  }
  func.func @transform_2(%arg0: i32) -> (i32, i32) {
    %c0_i32 = arith.constant 0 : i32
    %c0_i32_0 = arith.constant 0 : i32
    return %arg0, %c0_i32 : i32, i32
  }
  func.func @transform_3(%arg0: i32) -> (i32, i32) {
    %c0_i32 = arith.constant 0 : i32
    %c0_i32_0 = arith.constant 0 : i32
    return %arg0, %c0_i32 : i32, i32
  }
}

</mosaic_0001>

<llo_original>
// kernel: tpu_custom_call.1
$region0: #{tpu_custom_call.1}
  #allocation0 [shape = 'u32[]', space=smem, size = 0x4, offset = 0x4, fixed_abs, tag = 'smem constant byte address 0x4 - core index']
  #allocation1 [shape = 'u32[72,128]{1,0:T(1,128)}', space=vmem, size = 0x9000, scoped, tag = 'internal scratch']
  %s0 = inlined_call_operand.vmem [shape: bf16[512,64], index: 0, kind: input, shape index: {}]
  %s1 = inlined_call_operand.vmem [shape: bf16[64,256], index: 1, kind: input, shape index: {}]
  %s2 = inlined_call_operand.hbm [shape: bf16[512,128], index: 2, kind: output, shape index: {0}]
  %s3 = inlined_call_operand.hbm [shape: f32[512,128], index: 3, kind: output, shape index: {1}]
  %4 = xla_tuple %s2, %s3
  %s5 = sld [smem:[#allocation0]]
  $region49: #{tpu_custom_call.1} parent=0
    _
  %s7 = ssub.s32 1, %s5
  %s8 = scalar_select 0, %s7, %s5
  $region1: #{tpu_custom_call.1} parent=0
    #allocation2 [shape = 'u8[131072]{0}', space=vmem, size = 0x20000, scoped, tag = 'output window, operand 0']
    #allocation3 [shape = 's32[2]{0}', space=sflag, size = 0x8, scoped, tag = 'scoped memory for tpu_custom_call.1']
    #allocation4 [shape = 'u8[262144]{0}', space=vmem, size = 0x40000, scoped, tag = 'output window, operand 1']
    #allocation5 [shape = 's32[2]{0}', space=sflag, size = 0x8, scoped, tag = 'scoped memory for tpu_custom_call.1']
    %9 = vsyncpa [#allocation3], 0
    %s10 = scalar_lea.sflag [#allocation3], 1
    %11 = vsyncpa %s10, 0
    %12 = vsyncpa [#allocation5], 0
    %s13 = scalar_lea.sflag [#allocation5], 1
    %14 = vsyncpa %s13, 0
    loop: start=0, step=1, limit=4
    $region2: #{tpu_custom_call.1} parent=1 // loop_pre_header
      _
    $region3: #{tpu_custom_call.1} parent=1 // loop_header
      %s16 = sphi 0, %s20
      %p17 = scmp.ge.s32.totalorder %s16, 4
      %s26 = sphi 0, %s28
      %s29 = sphi 0, %s26
      %s30 = sphi 0, %s29
      %s46 = sphi 0, %s30
      %s50 = sphi 0, %s50
      %s52 = sphi 0, %s50
      %s53 = sphi 0, %s52
      %s67 = sphi 0, %s53
      %s73 = sphi 0, %s75
      %s76 = sphi 0, %s73
      %s77 = sphi 0, %s76
      %s93 = sphi 0, %s77
      %s99 = sphi 0, %s101
      %s102 = sphi 0, %s99
      %s103 = sphi 0, %s102
      %s119 = sphi 0, %s103
    $region4: #{tpu_custom_call.1} parent=1 // loop_header_branch
      %19 = sbr.rel (%p17) target = $region8
    $region5: #{tpu_custom_call.1} parent=1 // loop_body
      %s21 = ssub.s32 %s16, 1
      %s22 = ssub.s32 %s16, 2
      %s23 = sadd.s32 %s16, 1
      %s24 = ssub.s32 %s16, %s23
      %p25 = scmp.eq.s32.totalorder %s24, 0
      %s27 = sadd.s32 %s26, 1
      %s28 = scalar_select %p25, %s26, %s27
      %p31 = pneg %p25
      %p32 = scmp.eq.s32.totalorder %s16, 1
      %p33 = por %p31, %p32
      %p34 = scmp.ne.s32.totalorder %s26, %s29
      %p35 = scmp.eq.s32.totalorder %s16, 0
      %p36 = por %p34, %p35
      %p37 = scmp.ne.s32.totalorder %s26, %s29
      %p38 = scmp.eq.s32.totalorder %s21, 1
      %p39 = por %p37, %p38
      %p40 = scmp.ne.s32.totalorder %s29, %s30
      %p41 = scmp.eq.s32.totalorder %s21, 0
      %p42 = por %p40, %p41
      %p43 = scmp.ne.s32.totalorder %s29, %s30
      %p44 = scmp.eq.s32.totalorder %s22, 1
      %p45 = por %p43, %p44
      %p47 = scmp.ne.s32.totalorder %s30, %s46
      %p48 = scmp.eq.s32.totalorder %s22, 0
      %p49 = por %p47, %p48
      %s51 = sadd.s32 %s50, 1
      %p54 = scmp.eq.s32.totalorder %s16, 1
      %p55 = scmp.ne.s32.totalorder %s50, %s52
      %p56 = scmp.eq.s32.totalorder %s16, 0
      %p57 = por %p55, %p56
      %p58 = scmp.ne.s32.totalorder %s50, %s52
      %p59 = scmp.eq.s32.totalorder %s21, 1
      %p60 = por %p58, %p59
      %p61 = scmp.ne.s32.totalorder %s52, %s53
      %p62 = scmp.eq.s32.totalorder %s21, 0
      %p63 = por %p61, %p62
      %p64 = scmp.ne.s32.totalorder %s52, %s53
      %p65 = scmp.eq.s32.totalorder %s22, 1
      %p66 = por %p64, %p65
      %p68 = scmp.ne.s32.totalorder %s53, %s67
      %p69 = scmp.eq.s32.totalorder %s22, 0
      %p70 = por %p68, %p69
      %s71 = ssub.s32 %s16, %s23
      %p72 = scmp.eq.s32.totalorder %s71, 0
      %s74 = sadd.s32 %s73, 1
      %s75 = scalar_select %p72, %s73, %s74
      %p78 = pneg %p72
      %p79 = scmp.eq.s32.totalorder %s16, 1
      %p80 = por %p78, %p79
      %p81 = scmp.ne.s32.totalorder %s73, %s76
      %p82 = scmp.eq.s32.totalorder %s16, 0
      %p83 = por %p81, %p82
      %p84 = scmp.ne.s32.totalorder %s73, %s76
      %p85 = scmp.eq.s32.totalorder %s21, 1
      %p86 = por %p84, %p85
      %p87 = scmp.ne.s32.totalorder %s76, %s77
      %p88 = scmp.eq.s32.totalorder %s21, 0
      %p89 = por %p87, %p88
      %p90 = scmp.ne.s32.totalorder %s76, %s77
      %p91 = scmp.eq.s32.totalorder %s22, 1
      %p92 = por %p90, %p91
      %p94 = scmp.ne.s32.totalorder %s77, %s93
      %p95 = scmp.eq.s32.totalorder %s22, 0
      %p96 = por %p94, %p95
      %s97 = ssub.s32 %s16, %s23
      %p98 = scmp.eq.s32.totalorder %s97, 0
      %s100 = sadd.s32 %s99, 1
      %s101 = scalar_select %p98, %s99, %s100
      %p104 = pneg %p98
      %p105 = scmp.eq.s32.totalorder %s16, 1
      %p106 = por %p104, %p105
      %p107 = scmp.ne.s32.totalorder %s99, %s102
      %p108 = scmp.eq.s32.totalorder %s16, 0
      %p109 = por %p107, %p108
      %p110 = scmp.ne.s32.totalorder %s99, %s102
      %p111 = scmp.eq.s32.totalorder %s21, 1
      %p112 = por %p110, %p111
      %p113 = scmp.ne.s32.totalorder %s102, %s103
      %p114 = scmp.eq.s32.totalorder %s21, 0
      %p115 = por %p113, %p114
      %p116 = scmp.ne.s32.totalorder %s102, %s103
      %p117 = scmp.eq.s32.totalorder %s22, 1
      %p118 = por %p116, %p117
      %p120 = scmp.ne.s32.totalorder %s103, %s119
      %p121 = scmp.eq.s32.totalorder %s22, 0
      %p122 = por %p120, %p121
      %p123 = scmp.le.s32.totalorder 1, %s16
      %p124 = scmp.lt.s32.totalorder %s16, 3
      %p125 = pnand %p123, %p124
      %p126 = pneg %p125
      // Predicated region
      $region9: #{tpu_custom_call.1} parent=5 // pred_check
        _
      $region10: #{tpu_custom_call.1} parent=5 // pred_check_branch
        %128 = sbr.rel (%p125) target = $region12
      $region11: #{tpu_custom_call.1} parent=5 // pred_region
        %s129 = ssub.s32 %s16, 1
        // Predicated region
        $region13: #{tpu_custom_call.1} parent=11 // pred_check
          %p130 = pneg %p63
        $region14: #{tpu_custom_call.1} parent=11 // pred_check_branch
          %132 = sbr.rel (%p130) target = $region16
        $region15: #{tpu_custom_call.1} parent=11 // pred_region
          _
        $region16: #{tpu_custom_call.1} parent=11 // pred_fallthru
          _
      $region12: #{tpu_custom_call.1} parent=5 // pred_fallthru
        _
      %p133 = scmp.lt.s32.totalorder %s16, 2
      // Predicated region
      $region17: #{tpu_custom_call.1} parent=5 // pred_check
        %p134 = pneg %p133
      $region18: #{tpu_custom_call.1} parent=5 // pred_check_branch
        %136 = sbr.rel (%p134) target = $region20
      $region19: #{tpu_custom_call.1} parent=5 // pred_region
        // Predicated region
        $region21: #{tpu_custom_call.1} parent=19 // pred_check
          %p137 = pneg %p36
        $region22: #{tpu_custom_call.1} parent=19 // pred_check_branch
          %139 = sbr.rel (%p137) target = $region24
        $region23: #{tpu_custom_call.1} parent=19 // pred_region
          %s140 = smul.u32 32, %s16
          %p141 = scmp.lt.s32.totalorder %s140, 63
          %s142 = scalar_select %p141, %s140, 63
          %s143 = smul.addr %s142, 4
          %s144 = scalar_lea.vmem %s0, %s143
          %s145 = smul.u32 32, %s16
        $region24: #{tpu_custom_call.1} parent=19 // pred_fallthru
          _
      $region20: #{tpu_custom_call.1} parent=5 // pred_fallthru
        _
      %p146 = scmp.le.s32.totalorder 1, %s16
      %p147 = scmp.lt.s32.totalorder %s16, 3
      %p148 = pnand %p146, %p147
      %p149 = pneg %p148
      // Predicated region
      $region25: #{tpu_custom_call.1} parent=5 // pred_check
        _
      $region26: #{tpu_custom_call.1} parent=5 // pred_check_branch
        %151 = sbr.rel (%p148) target = $region28
      $region27: #{tpu_custom_call.1} parent=5 // pred_region
        %s152 = ssub.s32 %s16, 1
        %s153 = smul.u32 32, %s21
        %p154 = scmp.lt.s32.totalorder %s153, 63
        %s155 = scalar_select %p154, %s153, 63
        %s156 = smul.addr %s155, 4
        %s157 = scalar_lea.vmem %s0, %s156
        %p158 = pneg %p42
        %p159 = pneg %p39
        %p160 = pneg %p63
        %p161 = pneg %p60
        %p162 = pneg %p89
        %p163 = pneg %p86
        %s164 = sand.u32 %s76, 1
        %s165 = scalar_lea.sflag [#allocation3], %s164
        %s166 = sand.u32 %s76, 1
        %s167 = smul.addr %s166, 128
        %s168 = scalar_lea.vmem [#allocation2], %s167
        %p169 = pneg %p115
        %p170 = pneg %p112
        %s171 = sand.u32 %s102, 1
        %s172 = scalar_lea.sflag [#allocation5], %s171
        %s173 = sand.u32 %s102, 1
        %s174 = smul.addr %s173, 256
        %s175 = scalar_lea.vmem [#allocation4], %s174
        %s176 = smul.u32 32, %s21
        %p177 = scmp.lt.s32.totalorder %s176, 63
        %s178 = scalar_select %p177, %s176, 63
        %s179 = smul.addr %s178, 4
        %s180 = scalar_lea.vmem %s0, %s179
        %s181 = smul.u32 32, %s21
        %s182 = smul.u32 32, %s21
        %s183 = smul.u32 32, %s21
        %v185 = vld [vmem:[%s180] sm:$0xf]
        %v186 = vld [vmem:[%s180 + $0x4] sm:$0xf]
        %v187 = vld [vmem:[%s180 + $0x8] sm:$0xf]
        %v188 = vld [vmem:[%s180 + $0xc] sm:$0xf]
        %v189 = vld [vmem:[%s180 + $0x10] sm:$0xf]
        %v190 = vld [vmem:[%s180 + $0x14] sm:$0xf]
        %v191 = vld [vmem:[%s180 + $0x18] sm:$0xf]
        %v192 = vld [vmem:[%s180 + $0x1c] sm:$0xf]
        %v193 = vld [vmem:[%s180 + $0x20] sm:$0xf]
        %v194 = vld [vmem:[%s180 + $0x24] sm:$0xf]
        %v195 = vld [vmem:[%s180 + $0x28] sm:$0xf]
        %v196 = vld [vmem:[%s180 + $0x2c] sm:$0xf]
        %v197 = vld [vmem:[%s180 + $0x30] sm:$0xf]
        %v198 = vld [vmem:[%s180 + $0x34] sm:$0xf]
        %v199 = vld [vmem:[%s180 + $0x38] sm:$0xf]
        %v200 = vld [vmem:[%s180 + $0x3c] sm:$0xf]
        %v201 = vld [vmem:[%s180 + $0x40] sm:$0xf]
        %v202 = vld [vmem:[%s180 + $0x44] sm:$0xf]
        %v203 = vld [vmem:[%s180 + $0x48] sm:$0xf]
        %v204 = vld [vmem:[%s180 + $0x4c] sm:$0xf]
        %v205 = vld [vmem:[%s180 + $0x50] sm:$0xf]
        %v206 = vld [vmem:[%s180 + $0x54] sm:$0xf]
        %v207 = vld [vmem:[%s180 + $0x58] sm:$0xf]
        %v208 = vld [vmem:[%s180 + $0x5c] sm:$0xf]
        %v209 = vld [vmem:[%s180 + $0x60] sm:$0xf]
        %v210 = vld [vmem:[%s180 + $0x64] sm:$0xf]
        %v211 = vld [vmem:[%s180 + $0x68] sm:$0xf]
        %v212 = vld [vmem:[%s180 + $0x6c] sm:$0xf]
        %v213 = vld [vmem:[%s180 + $0x70] sm:$0xf]
        %v214 = vld [vmem:[%s180 + $0x74] sm:$0xf]
        %v215 = vld [vmem:[%s180 + $0x78] sm:$0xf]
        %v216 = vld [vmem:[%s180 + $0x7c] sm:$0xf]
        %v217 = vld [vmem:[%s1] sm:$0xff]
        %v218 = vld [vmem:[%s1 + $0x8] sm:$0xff]
        %v219 = vld [vmem:[%s1 + $0x10] sm:$0xff]
        %v220 = vld [vmem:[%s1 + $0x18] sm:$0xff]
        %v221 = vld [vmem:[%s1 + $0x20] sm:$0xff]
        %v222 = vld [vmem:[%s1 + $0x28] sm:$0xff]
        %v223 = vld [vmem:[%s1 + $0x30] sm:$0xff]
        %v224 = vld [vmem:[%s1 + $0x38] sm:$0xff]
        %v257 = vunpack.c.l.b16 %v185
        %v258 = vunpack.c.l.b16 %v186
        %v259 = vunpack.c.l.b16 %v187
        %v260 = vunpack.c.l.b16 %v188
        %v261 = vunpack.c.l.b16 %v189
        %v262 = vunpack.c.l.b16 %v190
        %v263 = vunpack.c.l.b16 %v191
        %v264 = vunpack.c.l.b16 %v192
        %v265 = vunpack.c.l.b16 %v193
        %v266 = vunpack.c.l.b16 %v194
        %v267 = vunpack.c.l.b16 %v195
        %v268 = vunpack.c.l.b16 %v196
        %v269 = vunpack.c.l.b16 %v197
        %v270 = vunpack.c.l.b16 %v198
        %v271 = vunpack.c.l.b16 %v199
        %v272 = vunpack.c.l.b16 %v200
        %v273 = vunpack.c.l.b16 %v201
        %v274 = vunpack.c.l.b16 %v202
        %v275 = vunpack.c.l.b16 %v203
        %v276 = vunpack.c.l.b16 %v204
        %v277 = vunpack.c.l.b16 %v205
        %v278 = vunpack.c.l.b16 %v206
        %v279 = vunpack.c.l.b16 %v207
        %v280 = vunpack.c.l.b16 %v208
        %v281 = vunpack.c.l.b16 %v209
        %v282 = vunpack.c.l.b16 %v210
        %v283 = vunpack.c.l.b16 %v211
        %v284 = vunpack.c.l.b16 %v212
        %v285 = vunpack.c.l.b16 %v213
        %v286 = vunpack.c.l.b16 %v214
        %v287 = vunpack.c.l.b16 %v215
        %v288 = vunpack.c.l.b16 %v216
        %v289 = vpack.c.b16 %v258, %v257
        %v290 = vpack.c.b16 %v260, %v259
        %v291 = vpack.c.b16 %v262, %v261
        %v292 = vpack.c.b16 %v264, %v263
        %v293 = vpack.c.b16 %v266, %v265
        %v294 = vpack.c.b16 %v268, %v267
        %v295 = vpack.c.b16 %v270, %v269
        %v296 = vpack.c.b16 %v272, %v271
        %v297 = vpack.c.b16 %v274, %v273
        %v298 = vpack.c.b16 %v276, %v275
        %v299 = vpack.c.b16 %v278, %v277
        %v300 = vpack.c.b16 %v280, %v279
        %v301 = vpack.c.b16 %v282, %v281
        %v302 = vpack.c.b16 %v284, %v283
        %v303 = vpack.c.b16 %v286, %v285
        %v304 = vpack.c.b16 %v288, %v287
        %v313 = vunpack.c.l.b16 %v217
        %v314 = vunpack.c.h.b16 %v217
        %v315 = vunpack.c.l.b16 %v218
        %v316 = vunpack.c.h.b16 %v218
        %v317 = vunpack.c.l.b16 %v219
        %v318 = vunpack.c.h.b16 %v219
        %v319 = vunpack.c.l.b16 %v220
        %v320 = vunpack.c.h.b16 %v220
        %v321 = vunpack.c.l.b16 %v221
        %v322 = vunpack.c.h.b16 %v221
        %v323 = vunpack.c.l.b16 %v222
        %v324 = vunpack.c.h.b16 %v222
        %v325 = vunpack.c.l.b16 %v223
        %v326 = vunpack.c.h.b16 %v223
        %v327 = vunpack.c.l.b16 %v224
        %v328 = vunpack.c.h.b16 %v224
        %v329 = vpack.c.b16 %v315, %v313
        %v330 = vpack.c.b16 %v316, %v314
        %v331 = vpack.c.b16 %v319, %v317
        %v332 = vpack.c.b16 %v320, %v318
        %v333 = vpack.c.b16 %v323, %v321
        %v334 = vpack.c.b16 %v324, %v322
        %v335 = vpack.c.b16 %v327, %v325
        %v336 = vpack.c.b16 %v328, %v326
        %vm345 = vcmask 523264
        %v347 = vsel %vm345, %v289, 0
        %v350 = vsel %vm345, %v290, 0
        %v353 = vsel %vm345, %v291, 0
        %v356 = vsel %vm345, %v292, 0
        %v359 = vsel %vm345, %v293, 0
        %v362 = vsel %vm345, %v294, 0
        %v365 = vsel %vm345, %v295, 0
        %v368 = vsel %vm345, %v296, 0
        %v371 = vsel %vm345, %v297, 0
        %v374 = vsel %vm345, %v298, 0
        %v377 = vsel %vm345, %v299, 0
        %v380 = vsel %vm345, %v300, 0
        %v383 = vsel %vm345, %v301, 0
        %v386 = vsel %vm345, %v302, 0
        %v389 = vsel %vm345, %v303, 0
        %v392 = vsel %vm345, %v304, 0
        %394 = vmatpush.bf16.msra.mxu0 0
        %395 = vmatpush.bf16.msra.mxu0 0
        %396 = vmatpush.bf16.msra.mxu0 0
        %397 = vmatpush.bf16.msra.mxu0 0
        %398 = vmatpush.bf16.msra.mxu0 %v335
        %399 = vmatpush.bf16.msra.mxu0 %v333
        %400 = vmatpush.bf16.msra.mxu0 %v331
        %401 = vmatpush.bf16.msra.mxu0 %v329
        %402 = vmatmul.bf16.gmra.mxu0 %v347
        %v403 = vpop.f32.mrf.mxu0
        %v404 = vadd.f32 0.0, %v403
        %v405 = vpop.f32.mrf.mxu0
        %v406 = vadd.f32 0.0, %v405
        %407 = vmatmul.bf16.gmra.mxu0 %v350
        %v408 = vpop.f32.mrf.mxu0
        %v409 = vadd.f32 0.0, %v408
        %v410 = vpop.f32.mrf.mxu0
        %v411 = vadd.f32 0.0, %v410
        %412 = vmatmul.bf16.gmra.mxu0 %v353
        %v413 = vpop.f32.mrf.mxu0
        %v414 = vadd.f32 0.0, %v413
        %v415 = vpop.f32.mrf.mxu0
        %v416 = vadd.f32 0.0, %v415
        %417 = vmatmul.bf16.gmra.mxu0 %v356
        %v418 = vpop.f32.mrf.mxu0
        %v419 = vadd.f32 0.0, %v418
        %v420 = vpop.f32.mrf.mxu0
        %v421 = vadd.f32 0.0, %v420
        %422 = vmatmul.bf16.gmra.mxu0 %v359
        %v423 = vpop.f32.mrf.mxu0
        %v424 = vadd.f32 0.0, %v423
        %v425 = vpop.f32.mrf.mxu0
        %v426 = vadd.f32 0.0, %v425
        %427 = vmatmul.bf16.gmra.mxu0 %v362
        %v428 = vpop.f32.mrf.mxu0
        %v429 = vadd.f32 0.0, %v428
        %v430 = vpop.f32.mrf.mxu0
        %v431 = vadd.f32 0.0, %v430
        %432 = vmatmul.bf16.gmra.mxu0 %v365
        %v433 = vpop.f32.mrf.mxu0
        %v434 = vadd.f32 0.0, %v433
        %v435 = vpop.f32.mrf.mxu0
        %v436 = vadd.f32 0.0, %v435
        %437 = vmatmul.bf16.gmra.mxu0 %v368
        %v438 = vpop.f32.mrf.mxu0
        %v439 = vadd.f32 0.0, %v438
        %v440 = vpop.f32.mrf.mxu0
        %v441 = vadd.f32 0.0, %v440
        %442 = vmatmul.bf16.gmra.mxu0 %v371
        %v443 = vpop.f32.mrf.mxu0
        %v444 = vadd.f32 0.0, %v443
        %v445 = vpop.f32.mrf.mxu0
        %v446 = vadd.f32 0.0, %v445
        %447 = vmatmul.bf16.gmra.mxu0 %v374
        %v448 = vpop.f32.mrf.mxu0
        %v449 = vadd.f32 0.0, %v448
        %v450 = vpop.f32.mrf.mxu0
        %v451 = vadd.f32 0.0, %v450
        %452 = vmatmul.bf16.gmra.mxu0 %v377
        %v453 = vpop.f32.mrf.mxu0
        %v454 = vadd.f32 0.0, %v453
        %v455 = vpop.f32.mrf.mxu0
        %v456 = vadd.f32 0.0, %v455
        %457 = vmatmul.bf16.gmra.mxu0 %v380
        %v458 = vpop.f32.mrf.mxu0
        %v459 = vadd.f32 0.0, %v458
        %v460 = vpop.f32.mrf.mxu0
        %v461 = vadd.f32 0.0, %v460
        %462 = vmatmul.bf16.gmra.mxu0 %v383
        %v463 = vpop.f32.mrf.mxu0
        %v464 = vadd.f32 0.0, %v463
        %v465 = vpop.f32.mrf.mxu0
        %v466 = vadd.f32 0.0, %v465
        %467 = vmatmul.bf16.gmra.mxu0 %v386
        %v468 = vpop.f32.mrf.mxu0
        %v469 = vadd.f32 0.0, %v468
        %v470 = vpop.f32.mrf.mxu0
        %v471 = vadd.f32 0.0, %v470
        %472 = vmatmul.bf16.gmra.mxu0 %v389
        %v473 = vpop.f32.mrf.mxu0
        %v474 = vadd.f32 0.0, %v473
        %v475 = vpop.f32.mrf.mxu0
        %v476 = vadd.f32 0.0, %v475
        %477 = vmatmul.bf16.gmra.mxu0 %v392
        %v478 = vpop.f32.mrf.mxu0
        %v479 = vadd.f32 0.0, %v478
        %v480 = vpop.f32.mrf.mxu0
        %v481 = vadd.f32 0.0, %v480
        %482 = vdwg.mxu0
        %483 = vmatpush.bf16.msra.mxu0 0
        %484 = vmatpush.bf16.msra.mxu0 0
        %485 = vmatpush.bf16.msra.mxu0 0
        %486 = vmatpush.bf16.msra.mxu0 0
        %487 = vmatpush.bf16.msra.mxu0 %v336
        %488 = vmatpush.bf16.msra.mxu0 %v334
        %489 = vmatpush.bf16.msra.mxu0 %v332
        %490 = vmatpush.bf16.msra.mxu0 %v330
        %491 = vmatmul.bf16.gmra.mxu0 %v347
        %v492 = vpop.f32.mrf.mxu0
        %v493 = vadd.f32 0.0, %v492
        %v494 = vpop.f32.mrf.mxu0
        %v495 = vadd.f32 0.0, %v494
        %496 = vmatmul.bf16.gmra.mxu0 %v350
        %v497 = vpop.f32.mrf.mxu0
        %v498 = vadd.f32 0.0, %v497
        %v499 = vpop.f32.mrf.mxu0
        %v500 = vadd.f32 0.0, %v499
        %501 = vmatmul.bf16.gmra.mxu0 %v353
        %v502 = vpop.f32.mrf.mxu0
        %v503 = vadd.f32 0.0, %v502
        %v504 = vpop.f32.mrf.mxu0
        %v505 = vadd.f32 0.0, %v504
        %506 = vmatmul.bf16.gmra.mxu0 %v356
        %v507 = vpop.f32.mrf.mxu0
        %v508 = vadd.f32 0.0, %v507
        %v509 = vpop.f32.mrf.mxu0
        %v510 = vadd.f32 0.0, %v509
        %511 = vmatmul.bf16.gmra.mxu0 %v359
        %v512 = vpop.f32.mrf.mxu0
        %v513 = vadd.f32 0.0, %v512
        %v514 = vpop.f32.mrf.mxu0
        %v515 = vadd.f32 0.0, %v514
        %516 = vmatmul.bf16.gmra.mxu0 %v362
        %v517 = vpop.f32.mrf.mxu0
        %v518 = vadd.f32 0.0, %v517
        %v519 = vpop.f32.mrf.mxu0
        %v520 = vadd.f32 0.0, %v519
        %521 = vmatmul.bf16.gmra.mxu0 %v365
        %v522 = vpop.f32.mrf.mxu0
        %v523 = vadd.f32 0.0, %v522
        %v524 = vpop.f32.mrf.mxu0
        %v525 = vadd.f32 0.0, %v524
        %526 = vmatmul.bf16.gmra.mxu0 %v368
        %v527 = vpop.f32.mrf.mxu0
        %v528 = vadd.f32 0.0, %v527
        %v529 = vpop.f32.mrf.mxu0
        %v530 = vadd.f32 0.0, %v529
        %531 = vmatmul.bf16.gmra.mxu0 %v371
        %v532 = vpop.f32.mrf.mxu0
        %v533 = vadd.f32 0.0, %v532
        %v534 = vpop.f32.mrf.mxu0
        %v535 = vadd.f32 0.0, %v534
        %536 = vmatmul.bf16.gmra.mxu0 %v374
        %v537 = vpop.f32.mrf.mxu0
        %v538 = vadd.f32 0.0, %v537
        %v539 = vpop.f32.mrf.mxu0
        %v540 = vadd.f32 0.0, %v539
        %541 = vmatmul.bf16.gmra.mxu0 %v377
        %v542 = vpop.f32.mrf.mxu0
        %v543 = vadd.f32 0.0, %v542
        %v544 = vpop.f32.mrf.mxu0
        %v545 = vadd.f32 0.0, %v544
        %546 = vmatmul.bf16.gmra.mxu0 %v380
        %v547 = vpop.f32.mrf.mxu0
        %v548 = vadd.f32 0.0, %v547
        %v549 = vpop.f32.mrf.mxu0
        %v550 = vadd.f32 0.0, %v549
        %551 = vmatmul.bf16.gmra.mxu0 %v383
        %v552 = vpop.f32.mrf.mxu0
        %v553 = vadd.f32 0.0, %v552
        %v554 = vpop.f32.mrf.mxu0
        %v555 = vadd.f32 0.0, %v554
        %556 = vmatmul.bf16.gmra.mxu0 %v386
        %v557 = vpop.f32.mrf.mxu0
        %v558 = vadd.f32 0.0, %v557
        %v559 = vpop.f32.mrf.mxu0
        %v560 = vadd.f32 0.0, %v559
        %561 = vmatmul.bf16.gmra.mxu0 %v389
        %v562 = vpop.f32.mrf.mxu0
        %v563 = vadd.f32 0.0, %v562
        %v564 = vpop.f32.mrf.mxu0
        %v565 = vadd.f32 0.0, %v564
        %566 = vmatmul.bf16.gmra.mxu0 %v392
        %v567 = vpop.f32.mrf.mxu0
        %v568 = vadd.f32 0.0, %v567
        %v569 = vpop.f32.mrf.mxu0
        %v570 = vadd.f32 0.0, %v569
        %571 = vdwg.mxu0
        %572 = vst [vmem:[%s175] sm:$0xff] %v404
        %573 = vst [vmem:[%s175 + $0x8] sm:$0xff] %v406
        %574 = vst [vmem:[%s175 + $0x10] sm:$0xff] %v409
        %575 = vst [vmem:[%s175 + $0x18] sm:$0xff] %v411
        %576 = vst [vmem:[%s175 + $0x20] sm:$0xff] %v414
        %577 = vst [vmem:[%s175 + $0x28] sm:$0xff] %v416
        %578 = vst [vmem:[%s175 + $0x30] sm:$0xff] %v419
        %579 = vst [vmem:[%s175 + $0x38] sm:$0xff] %v421
        %580 = vst [vmem:[%s175 + $0x40] sm:$0xff] %v424
        %581 = vst [vmem:[%s175 + $0x48] sm:$0xff] %v426
        %582 = vst [vmem:[%s175 + $0x50] sm:$0xff] %v429
        %583 = vst [vmem:[%s175 + $0x58] sm:$0xff] %v431
        %584 = vst [vmem:[%s175 + $0x60] sm:$0xff] %v434
        %585 = vst [vmem:[%s175 + $0x68] sm:$0xff] %v436
        %586 = vst [vmem:[%s175 + $0x70] sm:$0xff] %v439
        %587 = vst [vmem:[%s175 + $0x78] sm:$0xff] %v441
        %588 = vst [vmem:[%s175 + $0x80] sm:$0xff] %v444
        %589 = vst [vmem:[%s175 + $0x88] sm:$0xff] %v446
        %590 = vst [vmem:[%s175 + $0x90] sm:$0xff] %v449
        %591 = vst [vmem:[%s175 + $0x98] sm:$0xff] %v451
        %592 = vst [vmem:[%s175 + $0xa0] sm:$0xff] %v454
        %593 = vst [vmem:[%s175 + $0xa8] sm:$0xff] %v456
        %594 = vst [vmem:[%s175 + $0xb0] sm:$0xff] %v459
        %595 = vst [vmem:[%s175 + $0xb8] sm:$0xff] %v461
        %596 = vst [vmem:[%s175 + $0xc0] sm:$0xff] %v464
        %597 = vst [vmem:[%s175 + $0xc8] sm:$0xff] %v466
        %598 = vst [vmem:[%s175 + $0xd0] sm:$0xff] %v469
        %599 = vst [vmem:[%s175 + $0xd8] sm:$0xff] %v471
        %600 = vst [vmem:[%s175 + $0xe0] sm:$0xff] %v474
        %601 = vst [vmem:[%s175 + $0xe8] sm:$0xff] %v476
        %602 = vst [vmem:[%s175 + $0xf0] sm:$0xff] %v479
        %603 = vst [vmem:[%s175 + $0xf8] sm:$0xff] %v481
        %v604 = vpack.c.bf16 %v493, %v493
        %v605 = vpack.c.bf16 %v495, %v495
        %v606 = vpack.c.bf16 %v498, %v498
        %v607 = vpack.c.bf16 %v500, %v500
        %v608 = vpack.c.bf16 %v503, %v503
        %v609 = vpack.c.bf16 %v505, %v505
        %v610 = vpack.c.bf16 %v508, %v508
        %v611 = vpack.c.bf16 %v510, %v510
        %v612 = vpack.c.bf16 %v513, %v513
        %v613 = vpack.c.bf16 %v515, %v515
        %v614 = vpack.c.bf16 %v518, %v518
        %v615 = vpack.c.bf16 %v520, %v520
        %v616 = vpack.c.bf16 %v523, %v523
        %v617 = vpack.c.bf16 %v525, %v525
        %v618 = vpack.c.bf16 %v528, %v528
        %v619 = vpack.c.bf16 %v530, %v530
        %v620 = vpack.c.bf16 %v533, %v533
        %v621 = vpack.c.bf16 %v535, %v535
        %v622 = vpack.c.bf16 %v538, %v538
        %v623 = vpack.c.bf16 %v540, %v540
        %v624 = vpack.c.bf16 %v543, %v543
        %v625 = vpack.c.bf16 %v545, %v545
        %v626 = vpack.c.bf16 %v548, %v548
        %v627 = vpack.c.bf16 %v550, %v550
        %v628 = vpack.c.bf16 %v553, %v553
        %v629 = vpack.c.bf16 %v555, %v555
        %v630 = vpack.c.bf16 %v558, %v558
        %v631 = vpack.c.bf16 %v560, %v560
        %v632 = vpack.c.bf16 %v563, %v563
        %v633 = vpack.c.bf16 %v565, %v565
        %v634 = vpack.c.bf16 %v568, %v568
        %v635 = vpack.c.bf16 %v570, %v570
        %636 = vst [vmem:[%s168] sm:$0xf] %v604
        %637 = vst [vmem:[%s168 + $0x4] sm:$0xf] %v605
        %638 = vst [vmem:[%s168 + $0x8] sm:$0xf] %v606
        %639 = vst [vmem:[%s168 + $0xc] sm:$0xf] %v607
        %640 = vst [vmem:[%s168 + $0x10] sm:$0xf] %v608
        %641 = vst [vmem:[%s168 + $0x14] sm:$0xf] %v609
        %642 = vst [vmem:[%s168 + $0x18] sm:$0xf] %v610
        %643 = vst [vmem:[%s168 + $0x1c] sm:$0xf] %v611
        %644 = vst [vmem:[%s168 + $0x20] sm:$0xf] %v612
        %645 = vst [vmem:[%s168 + $0x24] sm:$0xf] %v613
        %646 = vst [vmem:[%s168 + $0x28] sm:$0xf] %v614
        %647 = vst [vmem:[%s168 + $0x2c] sm:$0xf] %v615
        %648 = vst [vmem:[%s168 + $0x30] sm:$0xf] %v616
        %649 = vst [vmem:[%s168 + $0x34] sm:$0xf] %v617
        %650 = vst [vmem:[%s168 + $0x38] sm:$0xf] %v618
        %651 = vst [vmem:[%s168 + $0x3c] sm:$0xf] %v619
        %652 = vst [vmem:[%s168 + $0x40] sm:$0xf] %v620
        %653 = vst [vmem:[%s168 + $0x44] sm:$0xf] %v621
        %654 = vst [vmem:[%s168 + $0x48] sm:$0xf] %v622
        %655 = vst [vmem:[%s168 + $0x4c] sm:$0xf] %v623
        %656 = vst [vmem:[%s168 + $0x50] sm:$0xf] %v624
        %657 = vst [vmem:[%s168 + $0x54] sm:$0xf] %v625
        %658 = vst [vmem:[%s168 + $0x58] sm:$0xf] %v626
        %659 = vst [vmem:[%s168 + $0x5c] sm:$0xf] %v627
        %660 = vst [vmem:[%s168 + $0x60] sm:$0xf] %v628
        %661 = vst [vmem:[%s168 + $0x64] sm:$0xf] %v629
        %662 = vst [vmem:[%s168 + $0x68] sm:$0xf] %v630
        %663 = vst [vmem:[%s168 + $0x6c] sm:$0xf] %v631
        %664 = vst [vmem:[%s168 + $0x70] sm:$0xf] %v632
        %665 = vst [vmem:[%s168 + $0x74] sm:$0xf] %v633
        %666 = vst [vmem:[%s168 + $0x78] sm:$0xf] %v634
        %667 = vst [vmem:[%s168 + $0x7c] sm:$0xf] %v635
        %s668 = sand.u32 %s76, 1
        %s669 = scalar_lea.sflag [#allocation3], %s668
        %s670 = sand.u32 %s76, 1
        %s671 = smul.addr %s670, 128
        %s672 = scalar_lea.vmem [#allocation2], %s671
        %s673 = sand.u32 %s102, 1
        %s674 = scalar_lea.sflag [#allocation5], %s673
        %s675 = sand.u32 %s102, 1
        %s676 = smul.addr %s675, 256
        %s677 = scalar_lea.vmem [#allocation4], %s676
        // Predicated region
        $region29: #{tpu_custom_call.1} parent=27 // pred_check
          %p678 = pneg %p86
        $region30: #{tpu_custom_call.1} parent=27 // pred_check_branch
          %680 = sbr.rel (%p678) target = $region32
        $region31: #{tpu_custom_call.1} parent=27 // pred_region
          %s681 = smul.u32 32, %s21
          %683 = vsyncadd %s669, 0
          %s684 = smul.addr %s681, 4
          %s685 = scalar_lea.hbm %s2, %s684
          %s686 = sshll.u32 %s672, 4
          %s687 = int_to_ptr.vmem [resolvable:$true] %s686
          %s688 = sshll.u32 %s685, 4
          %s689 = int_to_ptr.hbm [resolvable:$true] %s688
          %694 = dma.vmem_to_hbm [thread:$0]  %s687, 2048, %s689, %s669, 64, 64, 4
        $region32: #{tpu_custom_call.1} parent=27 // pred_fallthru
          _
        // Predicated region
        $region33: #{tpu_custom_call.1} parent=27 // pred_check
          %p695 = pneg %p112
        $region34: #{tpu_custom_call.1} parent=27 // pred_check_branch
          %697 = sbr.rel (%p695) target = $region36
        $region35: #{tpu_custom_call.1} parent=27 // pred_region
          %s698 = smul.u32 32, %s21
          %700 = vsyncadd %s674, 0
          %s701 = smul.addr %s698, 8
          %s702 = scalar_lea.hbm %s3, %s701
          %s703 = sshll.u32 %s677, 4
          %s704 = int_to_ptr.vmem [resolvable:$true] %s703
          %s705 = sshll.u32 %s702, 4
          %s706 = int_to_ptr.hbm [resolvable:$true] %s705
          %711 = dma.vmem_to_hbm [thread:$0]  %s704, 4096, %s706, %s674, 128, 128, 8
        $region36: #{tpu_custom_call.1} parent=27 // pred_fallthru
          _
      $region28: #{tpu_custom_call.1} parent=5 // pred_fallthru
        _
      %p712 = scmp.le.s32.totalorder 2, %s16
      // Predicated region
      $region37: #{tpu_custom_call.1} parent=5 // pred_check
        %p713 = pneg %p712
      $region38: #{tpu_custom_call.1} parent=5 // pred_check_branch
        %715 = sbr.rel (%p713) target = $region40
      $region39: #{tpu_custom_call.1} parent=5 // pred_region
        %s716 = ssub.s32 %s16, 2
        // Predicated region
        $region41: #{tpu_custom_call.1} parent=39 // pred_check
          %p717 = pneg %p92
        $region42: #{tpu_custom_call.1} parent=39 // pred_check_branch
          %719 = sbr.rel (%p717) target = $region44
        $region43: #{tpu_custom_call.1} parent=39 // pred_region
          %s720 = sand.u32 %s77, 1
          %s721 = scalar_lea.sflag [#allocation3], %s720
          %s722 = sand.u32 %s77, 1
          %s723 = smul.addr %s722, 128
          %s724 = scalar_lea.vmem [#allocation2], %s723
          %726 = dma.done %s721, 2048
        $region44: #{tpu_custom_call.1} parent=39 // pred_fallthru
          _
        // Predicated region
        $region45: #{tpu_custom_call.1} parent=39 // pred_check
          %p727 = pneg %p118
        $region46: #{tpu_custom_call.1} parent=39 // pred_check_branch
          %729 = sbr.rel (%p727) target = $region48
        $region47: #{tpu_custom_call.1} parent=39 // pred_region
          %s730 = sand.u32 %s103, 1
          %s731 = scalar_lea.sflag [#allocation5], %s730
          %s732 = sand.u32 %s103, 1
          %s733 = smul.addr %s732, 256
          %s734 = scalar_lea.vmem [#allocation4], %s733
          %736 = dma.done %s731, 4096
        $region48: #{tpu_custom_call.1} parent=39 // pred_fallthru
          _
      $region40: #{tpu_custom_call.1} parent=5 // pred_fallthru
        _
    $region6: #{tpu_custom_call.1} parent=1 // loop_footer
      %s20 = sadd.s32 1, %s16
    $region7: #{tpu_custom_call.1} parent=1 // loop_footer_branch
      %15 = sbr.rel target = $region3
    $region8: #{tpu_custom_call.1} parent=1 // loop_exit
      _
    %737 = vsyncpa [#allocation3], 1
    %s738 = scalar_lea.sflag [#allocation3], 1
    %739 = vsyncpa %s738, 1
    %740 = vsyncpa [#allocation5], 1
    %s741 = scalar_lea.sflag [#allocation5], 1
    %742 = vsyncpa %s741, 1

</llo_original>
